<compile_context>
chip_gen: v7x
topology: tpu7x:2x2x1
jax: 0.10.0
libtpu: 0.0.40
codegen_flags: <defaults>
</compile_context>

<pallas_src>
import functools

import jax
import jax.numpy as jnp
from jax.experimental import pallas as pl
from jax.experimental.pallas import tpu as pltpu


def _round_up(x, m):
    return ((x + m - 1) // m) * m


def _sublane_multiple(dtype):
    itemsize = jnp.dtype(dtype).itemsize
    return max(8, 8 * (4 // max(itemsize, 1)))  # 8 (f32) / 16 (bf16) / 32 (int8)


def _chip_traits():
    """(is_v7x, multi_tensorcore) from the device kind, conservatively."""
    try:
        kind = jax.devices()[0].device_kind.lower()
    except Exception:  # pragma: no cover - defensive
        kind = ""
    is_v7 = ("v7" in kind) or ("7x" in kind)
    multi_tc = is_v7 or ("v4" in kind) or ("v5p" in kind)
    return is_v7, multi_tc


def _pick_row_tile(n, d_block, dtype, masked, target_bytes):
    """Largest row tile whose lane-padded VMEM footprint fits ~target_bytes."""
    sub = _sublane_multiple(dtype)
    itemsize = jnp.dtype(dtype).itemsize
    row_bytes = _round_up(d_block, 128) * itemsize
    if masked:
        row_bytes += itemsize  # lane-dense (1, tn) mask adds ~itemsize/row
    tn = (target_bytes // row_bytes) // sub * sub
    return max(sub, min(int(tn), 32768))


def _mean_kernel(feat_ref, out_ref, *, inv_n, tn, n_rows, ragged):
    """No-mask path. grid = (d_tiles, n_tiles); N is the innermost axis."""
    i = pl.program_id(1)
    last = pl.num_programs(1) - 1

    @pl.when(i == 0)
    def _init():
        out_ref[...] = jnp.zeros_like(out_ref)

    if ragged:
        @pl.when(i != last)
        def _full():
            f = feat_ref[...].astype(jnp.float32)
            out_ref[...] += jnp.sum(f, axis=0, keepdims=True)

        @pl.when(i == last)
        def _partial():
            f = feat_ref[...].astype(jnp.float32)
            rows = i * tn + jax.lax.broadcasted_iota(jnp.int32, f.shape, 0)
            f = jnp.where(rows < n_rows, f, 0.0)
            out_ref[...] += jnp.sum(f, axis=0, keepdims=True)
    else:
        f = feat_ref[...].astype(jnp.float32)
        out_ref[...] += jnp.sum(f, axis=0, keepdims=True)

    @pl.when(i == last)
    def _finalize():
        out_ref[...] *= inv_n


def _masked_mean_kernel(cnt_ref, feat_ref, msk_ref, out_ref, *, tn, n_rows, ragged):
    """Masked path: (1,tn) x (tn,td) matvec on the MXU, count from SMEM."""
    i = pl.program_id(1)
    last = pl.num_programs(1) - 1
    dnums = (((1,), (0,)), ((), ()))

    @pl.when(i == 0)
    def _init():
        out_ref[...] = jnp.zeros_like(out_ref)

    if ragged:
        @pl.when(i != last)
        def _full():
            out_ref[...] += jax.lax.dot_general(
                msk_ref[...], feat_ref[...], dnums,
                preferred_element_type=jnp.float32)

        @pl.when(i == last)
        def _partial():
            f = feat_ref[...]
            m = msk_ref[...]
            rows = i * tn + jax.lax.broadcasted_iota(jnp.int32, f.shape, 0)
            f = jnp.where(rows < n_rows, f, jnp.zeros_like(f))
            cols = i * tn + jax.lax.broadcasted_iota(jnp.int32, m.shape, 1)
            m = jnp.where(cols < n_rows, m, jnp.zeros_like(m))
            out_ref[...] += jax.lax.dot_general(
                m, f, dnums, preferred_element_type=jnp.float32)
    else:
        out_ref[...] += jax.lax.dot_general(
            msk_ref[...], feat_ref[...], dnums,
            preferred_element_type=jnp.float32)

    @pl.when(i == last)
    def _finalize():
        cnt = cnt_ref[0].astype(jnp.float32)
        out_ref[...] = out_ref[...] / cnt  # empty mask -> NaN, matches torch.mean


@functools.partial(jax.jit, static_argnames=("row_tile",))
def avg_readout(feat, msk=None, *, row_tile=None):
    """Pallas implementation of AvgReadout.forward(feat, msk). msk is boolean."""
    n, d = feat.shape
    masked = msk is not None
    orig_dtype = feat.dtype
    inv_n = 1.0 / n

    is_v7, multi_tc = _chip_traits()
    # v7x: 64 MiB physical VMEM -> ~10 MiB tiles; v5e/v6e: 128 MiB -> ~12 MiB.
    target_bytes, vmem_limit = ((10 << 20, 30 << 20) if is_v7
                                else (12 << 20, 48 << 20))

    # Narrow-D lane packing (no-mask path only): (N, D) -> (N/k, k*D) view.
    fold = 1
    if (not masked) and d < 128 and (128 % d == 0):
        k = 128 // d
        if n % k == 0:
            feat = feat.reshape(n // k, k * d)
            fold = k
    nk, dk = feat.shape  # kernel-facing shape

    # Split the independent D axis only where a second TensorCore can use it.
    if multi_tc and dk >= 256 and dk % 256 == 0:
        td, d_tiles = dk // 2, 2
    else:
        td, d_tiles = dk, 1

    sub = _sublane_multiple(feat.dtype)
    if row_tile is not None:
        tn = _round_up(int(row_tile), sub)
    else:
        tn = _pick_row_tile(nk, td, feat.dtype, masked, target_bytes)
    if masked and tn < nk and tn % 128 != 0:
        tn = _round_up(tn, 128)  # mask (1, tn) lane dim must be 128-aligned
    if tn >= nk:
        tn = nk  # single full-extent row tile
    n_tiles = (nk + tn - 1) // tn
    ragged = (nk % tn) != 0

    grid = (d_tiles, n_tiles)
    cparams = pltpu.CompilerParams(
        dimension_semantics=("parallel", "arbitrary"),
        vmem_limit_bytes=vmem_limit,
    )
    out_sds = jax.ShapeDtypeStruct((1, dk), jnp.float32)

    if not masked:
        kernel = functools.partial(
            _mean_kernel, inv_n=inv_n, tn=tn, n_rows=nk, ragged=ragged)
        out = pl.pallas_call(
            kernel,
            out_shape=out_sds,
            grid_spec=pltpu.PrefetchScalarGridSpec(
                num_scalar_prefetch=0,
                grid=grid,
                in_specs=[pl.BlockSpec((tn, td), lambda j, i: (i, j))],
                out_specs=pl.BlockSpec((1, td), lambda j, i: (0, j)),
            ),
            compiler_params=cparams,
        )(feat)
        if fold > 1:
            out = out.reshape(fold, d).sum(axis=0, keepdims=True)
    else:
        mask_row = msk.reshape(1, n).astype(feat.dtype)       # lane-dense mask
        count = jnp.sum(msk.astype(jnp.int32)).reshape(1)     # selected rows
        kernel = functools.partial(
            _masked_mean_kernel, tn=tn, n_rows=nk, ragged=ragged)
        out = pl.pallas_call(
            kernel,
            out_shape=out_sds,
            grid_spec=pltpu.PrefetchScalarGridSpec(
                num_scalar_prefetch=1,
                grid=grid,
                in_specs=[
                    pl.BlockSpec((tn, td), lambda j, i, c: (i, j)),
                    pl.BlockSpec((1, tn), lambda j, i, c: (0, i)),
                ],
                out_specs=pl.BlockSpec((1, td), lambda j, i, c: (0, j)),
            ),
            compiler_params=cparams,
        )(count, feat, mask_row)

    # torch.mean returns the input's floating dtype.
    return out[0].astype(orig_dtype)


def _ref_mean(feat):
    return jnp.mean(feat.astype(jnp.float32), axis=0)


def _ref_masked_mean(feat, msk):
    f = feat.astype(jnp.float32)
    s = jnp.sum(jnp.where(msk[:, None], f, 0.0), axis=0)
    return s / jnp.sum(msk.astype(jnp.float32))


if __name__ == "__main__":
    key = jax.random.PRNGKey(0)
    k1, k2, k3, k4, k5, k6 = jax.random.split(key, 6)
    TOL = dict(atol=1e-4, rtol=1e-4)

    # Case 1: small (N=16, D=32) -- no-mask (narrow-D packing) and masked paths.
    feat = jax.random.normal(k1, (16, 32), dtype=jnp.float32)
    msk = jax.random.bernoulli(k2, p=0.5, shape=(16,)).at[0].set(True)
    out_none = jax.block_until_ready(avg_readout(feat))
    out_msk = jax.block_until_ready(avg_readout(feat, msk))
    assert out_none.shape == (32,) and out_msk.shape == (32,)
    assert jnp.allclose(out_none, _ref_mean(feat), **TOL)
    assert jnp.allclose(out_msk, _ref_masked_mean(feat, msk), **TOL)

    # Case 2: ragged N with a forced small tile (row_tile normalization path).
    feat2 = jax.random.normal(k3, (20, 32), dtype=jnp.float32)
    msk2 = jax.random.bernoulli(k4, p=0.5, shape=(20,)).at[0].set(True)
    out2_none = jax.block_until_ready(avg_readout(feat2, row_tile=8))
    out2_msk = jax.block_until_ready(avg_readout(feat2, msk2, row_tile=8))
    assert jnp.allclose(out2_none, _ref_mean(feat2), **TOL)
    assert jnp.allclose(out2_msk, _ref_masked_mean(feat2, msk2), **TOL)

    # Case 3: multi-tile + ragged last tile (N=300, D=128, tn=128), both paths.
    feat3 = jax.random.normal(k5, (300, 128), dtype=jnp.float32)
    msk3 = jax.random.bernoulli(k6, p=0.5, shape=(300,)).at[0].set(True)
    out3_none = jax.block_until_ready(avg_readout(feat3, row_tile=128))
    out3_msk = jax.block_until_ready(avg_readout(feat3, msk3, row_tile=128))
    assert jnp.allclose(out3_none, _ref_mean(feat3), **TOL)
    assert jnp.allclose(out3_msk, _ref_masked_mean(feat3, msk3), **TOL)

    # Case 4: narrow-D packing with multiple ragged row tiles (N=328, D=32).
    feat4 = jax.random.normal(k2, (328, 32), dtype=jnp.float32)
    out4 = jax.block_until_ready(avg_readout(feat4, row_tile=8))
    assert jnp.allclose(out4, _ref_mean(feat4), **TOL)

    # Case 5: D=256 exercises the (multi-TC only) D-split heuristic, both paths.
    feat5 = jax.random.normal(k1, (40, 256), dtype=jnp.float32)
    msk5 = jax.random.bernoulli(k3, p=0.5, shape=(40,)).at[0].set(True)
    out5_none = jax.block_until_ready(avg_readout(feat5))
    out5_msk = jax.block_until_ready(avg_readout(feat5, msk5))
    assert jnp.allclose(out5_none, _ref_mean(feat5), **TOL)
    assert jnp.allclose(out5_msk, _ref_masked_mean(feat5, msk5), **TOL)

    print("KERNEL_OK")
</pallas_src>

<mosaic_0001>
module attributes {stable_mosaic.version = 11 : i64} {
  func.func @_mean_kernel(%arg0: i32, %arg1: i32, %arg2: memref<4x128xf32, #tpu.memory_space<vmem>>, %arg3: memref<1x128xf32, #tpu.memory_space<vmem>>) attributes {dimension_semantics = [#tpu.dimension_semantics<parallel>, #tpu.dimension_semantics<arbitrary>], iteration_bounds = array<i64: 1, 1>, scalar_prefetch = 0 : i64, scratch_operands = 0 : i64, tpu.core_type = #tpu.core_type<tc>, window_params = [{transform_indices = @transform_0, window_bounds = array<i64: 4, 128>}, {transform_indices = @transform_1, window_bounds = array<i64: 1, 128>}]} {
    %c0_i32 = arith.constant 0 : i32
    %0 = arith.cmpi eq, %arg1, %c0_i32 : i32
    %1 = arith.extui %0 : i1 to i32
    %c0_i32_0 = arith.constant 0 : i32
    %2 = arith.cmpi ne, %1, %c0_i32_0 : i32
    scf.if %2 {
      %cst_8 = arith.constant 0.000000e+00 : f32
      %12 = vector.broadcast %cst_8 : f32 to vector<1x128xf32>
      %c0_9 = arith.constant 0 : index
      %c0_10 = arith.constant 0 : index
      %13 = vector.load %arg3[%c0_9, %c0_10] : memref<1x128xf32, #tpu.memory_space<vmem>>, vector<1x128xf32>
      tpu.vector_store %arg3[%c0_9, %c0_10], %12 {strides = array<i32>} : memref<1x128xf32, #tpu.memory_space<vmem>>, vector<1x128xf32>,
    } else {
    }
    %c0 = arith.constant 0 : index
    %c0_1 = arith.constant 0 : index
    %3 = vector.load %arg2[%c0, %c0_1] : memref<4x128xf32, #tpu.memory_space<vmem>>, vector<4x128xf32>
    %c0_2 = arith.constant 0 : index
    %c0_3 = arith.constant 0 : index
    %4 = vector.load %arg3[%c0_2, %c0_3] : memref<1x128xf32, #tpu.memory_space<vmem>>, vector<1x128xf32>
    %cst = arith.constant dense<0.000000e+00> : vector<128xf32>
    %5 = vector.multi_reduction <add>, %3, %cst [0] : vector<4x128xf32> to vector<128xf32>
    %6 = vector.shape_cast %5 : vector<128xf32> to vector<1x128xf32>
    %7 = arith.addf %4, %6 : vector<1x128xf32>
    %c0_4 = arith.constant 0 : index
    %c0_5 = arith.constant 0 : index
    %8 = vector.load %arg3[%c0_4, %c0_5] : memref<1x128xf32, #tpu.memory_space<vmem>>, vector<1x128xf32>
    tpu.vector_store %arg3[%c0_4, %c0_5], %7 {strides = array<i32>} : memref<1x128xf32, #tpu.memory_space<vmem>>, vector<1x128xf32>,
    %c0_i32_6 = arith.constant 0 : i32
    %9 = arith.cmpi eq, %arg1, %c0_i32_6 : i32
    %10 = arith.extui %9 : i1 to i32
    %c0_i32_7 = arith.constant 0 : i32
    %11 = arith.cmpi ne, %10, %c0_i32_7 : i32
    scf.if %11 {
      %c0_8 = arith.constant 0 : index
      %c0_9 = arith.constant 0 : index
      %12 = vector.load %arg3[%c0_8, %c0_9] : memref<1x128xf32, #tpu.memory_space<vmem>>, vector<1x128xf32>
      %cst_10 = arith.constant 6.250000e-02 : f32
      %13 = vector.broadcast %cst_10 : f32 to vector<1x128xf32>
      %14 = arith.mulf %12, %13 : vector<1x128xf32>
      %c0_11 = arith.constant 0 : index
      %c0_12 = arith.constant 0 : index
      %15 = vector.load %arg3[%c0_11, %c0_12] : memref<1x128xf32, #tpu.memory_space<vmem>>, vector<1x128xf32>
      tpu.vector_store %arg3[%c0_11, %c0_12], %14 {strides = array<i32>} : memref<1x128xf32, #tpu.memory_space<vmem>>, vector<1x128xf32>,
    } else {
    }
    return
  }
  func.func @transform_0(%arg0: i32, %arg1: i32) -> (i32, i32) {
    %c0_i32 = arith.constant 0 : i32
    return %arg1, %arg0 : i32, i32
  }
  func.func @transform_1(%arg0: i32, %arg1: i32) -> (i32, i32) {
    %c0_i32 = arith.constant 0 : i32
    %c0_i32_0 = arith.constant 0 : i32
    return %c0_i32, %arg0 : i32, i32
  }
}

</mosaic_0001>

<llo_original>
// kernel: avg_readout.1
$region0: #{avg_readout.1}
  #allocation0 [shape = 'u32[]', space=smem, size = 0x4, offset = 0x4, fixed_abs, tag = 'smem constant byte address 0x4 - core index']
  #allocation1 [shape = 'u32[144,128]{1,0:T(1,128)}', space=vmem, size = 0x12000, scoped, tag = 'internal scratch']
  %s0 = inlined_call_operand.vmem [shape: f32[4,128], index: 0, kind: input, shape index: {}]
  %s1 = inlined_call_operand.vmem [shape: f32[1,128], index: 1, kind: output, shape index: {}]
  %s2 = sld [smem:[#allocation0]]
  $region22: #{avg_readout.1} parent=0
    _
  %s4 = ssub.s32 1, %s2
  %s5 = scalar_select 0, %s4, %s2
  // Predicated region
  $region2: #{avg_readout.1} parent=0 // pred_check
    _
  $region3: #{avg_readout.1} parent=0 // pred_check_branch
    %7 = sbr.rel (0) target = $region5
  $region4: #{avg_readout.1} parent=0 // pred_region
    _
  $region5: #{avg_readout.1} parent=0 // pred_fallthru
    _
  %p8 = scmp.eq.s32.totalorder 0, 0
  // Predicated region
  $region6: #{avg_readout.1} parent=0 // pred_check
    %p9 = pneg %p8
  $region7: #{avg_readout.1} parent=0 // pred_check_branch
    %11 = sbr.rel (%p9) target = $region9
  $region8: #{avg_readout.1} parent=0 // pred_region
    %12 = vst [vmem:[%s1] sm:$0x1] 0.0
  $region9: #{avg_readout.1} parent=0 // pred_fallthru
    _
  %v13 = vld [vmem:[%s0] sm:$0xf]
  %v14 = vld [vmem:[%s1] sm:$0x1]
  %vm15 = vcmask 1043456
  %v16 = vsel %vm15, %v13, 0.0
  %v17 = vrot.slane %v16, 4
  %v18 = vadd.f32 %v16, %v17
  %v19 = vrot.slane %v18, 2
  %v20 = vadd.f32 %v18, %v19
  %v21 = vrot.slane %v20, 1
  %v22 = vadd.f32 %v20, %v21
  %v23 = vadd.f32 %v14, %v22
  %24 = vst [vmem:[%s1] sm:$0x1] %v23
  // Predicated region
  $region10: #{avg_readout.1} parent=0 // pred_check
    %p25 = pneg %p8
  $region11: #{avg_readout.1} parent=0 // pred_check_branch
    %27 = sbr.rel (%p25) target = $region13
  $region12: #{avg_readout.1} parent=0 // pred_region
    %v28 = vld [vmem:[%s1] sm:$0x1]
    %v29 = vmul.f32 %v28, 0.0625
    %30 = vst [vmem:[%s1] sm:$0x1] %v29
  $region13: #{avg_readout.1} parent=0 // pred_fallthru
    _
  // Predicated region
  $region14: #{avg_readout.1} parent=0 // pred_check
    _
  $region15: #{avg_readout.1} parent=0 // pred_check_branch
    %32 = sbr.rel (0) target = $region17
  $region16: #{avg_readout.1} parent=0 // pred_region
    _
  $region17: #{avg_readout.1} parent=0 // pred_fallthru
    _
  // Predicated region
  $region18: #{avg_readout.1} parent=0 // pred_check
    _
  $region19: #{avg_readout.1} parent=0 // pred_check_branch
    %34 = sbr.rel (0) target = $region21
  $region20: #{avg_readout.1} parent=0 // pred_region
    _
  $region21: #{avg_readout.1} parent=0 // pred_fallthru
    _

</llo_original>
